<compile_context>
chip_gen: v6e
topology: v6e:2x2x1
jax: 0.10.0
libtpu: 0.0.40
codegen_flags: <defaults>
</compile_context>

<pallas_src>
import math
import functools

import jax
import jax.numpy as jnp
from jax.experimental import pallas as pl
from jax.experimental.pallas import tpu as pltpu

_LANE = 128
_TARGET_BLOCK_BYTES = 2 * 1024 * 1024    # per-block byte target (dtype independent)
_SMALL_FALLBACK_BYTES = 64 * 1024        # below this, fused XLA beats kernel launch
_MIN_SPLIT_BYTES = 512 * 1024            # above this, keep >=2 grid steps for v7x TCs
_SHIFT = math.log(2.0)


def _act_math(x, act: str, slope: float, shift: float):
    """Activation math shared by the kernel and the small/ragged fallback.

    Python-float constants are weakly typed, so bf16 inputs stay bf16.
    """

    def softplus(v):
        # Numerically stable softplus, matches F.softplus(beta=1, threshold=20).
        return jnp.maximum(v, 0.0) + jnp.log1p(jnp.exp(-jnp.abs(v)))

    if act == "relu":
        return jnp.maximum(x, 0.0)
    if act == "leaky_relu":
        # F.leaky_relu default negative_slope = 0.01
        return jnp.where(x >= 0.0, x, 0.01 * x)
    if act == "sp":
        return softplus(x)
    if act == "leaky_sp":
        return softplus(x) - slope * jnp.maximum(-x, 0.0)
    if act == "elu":
        # F.elu(alpha=1.0). NOTE: expm1 on the unselected branch can be inf for
        # large positive x; masked by jnp.where (forward-only kernel).
        return jnp.where(x > 0.0, x, jnp.expm1(x))
    if act == "leaky_elu":
        return jnp.where(x > 0.0, x, jnp.expm1(x)) - slope * jnp.maximum(-x, 0.0)
    if act == "ssp":
        return softplus(x) - shift
    if act == "leaky_ssp":
        return softplus(x) - slope * jnp.maximum(-x, 0.0) - shift
    if act == "tanh":
        return jnp.tanh(x)
    if act == "leaky_tanh":
        return jnp.tanh(x) + slope * x
    if act == "swish":
        return jax.nn.sigmoid(x) * x
    if act == "softsign":
        return x / (1.0 + jnp.abs(x))
    raise RuntimeError(f"Undefined activation called {act}")


def _make_act_kernel(act: str, slope: float, shift: float):
    """Elementwise Pallas kernel for the chosen activation."""

    def kernel(x_ref, o_ref):
        x = x_ref[...]
        # bf16 stays in native bf16 (bf16 VPU/EUP on v6e/v7x keeps this kernel
        # HBM-bound; matches torch bf16 semantics). Other non-f32 dtypes -> f32.
        if x.dtype.name not in ("float32", "bfloat16"):
            x = x.astype(jnp.float32)
        o_ref[...] = _act_math(x, act, slope, shift).astype(o_ref.dtype)

    return kernel


@functools.partial(jax.jit, static_argnames=("act", "slope", "donate_x"))
def act_forward(x, act: str, slope: float = 0.05, donate_x: bool = False):
    """Pallas equivalent of Act(act, slope)(x) for arbitrary input shape."""
    shift = _SHIFT
    orig_shape = x.shape
    total = x.size
    itemsize = x.dtype.itemsize
    total_bytes = total * itemsize

    # Tiny tensors: a fused XLA elementwise op is strictly cheaper than the
    # fixed pallas_call launch + single-step pipeline overhead.
    if total == 0 or total_bytes < _SMALL_FALLBACK_BYTES:
        return _act_math(x, act, float(slope), shift).astype(x.dtype)

    # Widest lane-dense width that divides the element count exactly: no pad,
    # no tail slice, unmasked full-width stores.
    width = None
    for w in (2048, 1024, 512, 256, 128):
        if total % w == 0:
            width = w
            break
    if width is None:
        # Ragged element count (not a multiple of 128 lanes). A fused XLA
        # elementwise op is already one HBM read + one write (roofline); the
        # old pad + kernel + slice path cost ~3x that.
        # TODO(synk): in-kernel tail masking would let Pallas own this path too.
        return _act_math(x, act, float(slope), shift).astype(x.dtype)

    rows = total // width
    x2 = x.reshape(rows, width)

    # Byte-based block sizing: ~2 MiB per block regardless of dtype.
    # Row-block is a multiple of 32 sublanes (legal for f32/bf16/int8 tiles).
    bytes_per_row = width * itemsize
    block_rows = max(32, (_TARGET_BLOCK_BYTES // bytes_per_row) // 32 * 32)

    if rows <= block_rows:
        if total_bytes >= _MIN_SPLIT_BYTES and rows >= 64:
            # Medium arrays: keep >=2 grid steps so the "parallel" axis can be
            # sharded across v7x's two TensorCores instead of leaving one idle.
            half = (((rows + 1) // 2) + 31) // 32 * 32
            block_rows = max(32, min(block_rows, half))
        else:
            block_rows = rows  # full-extent single block (always legal)

    grid = (pl.cdiv(rows, block_rows),)  # ragged last row-block masked by Pallas

    out2 = pl.pallas_call(
        _make_act_kernel(act, float(slope), shift),
        out_shape=jax.ShapeDtypeStruct((rows, width), x.dtype),
        grid=grid,
        in_specs=[pl.BlockSpec((block_rows, width), lambda i: (i, 0))],
        out_specs=pl.BlockSpec((block_rows, width), lambda i: (i, 0)),
        compiler_params=pltpu.CompilerParams(
            dimension_semantics=("parallel",),   # shards across v7x's 2 TCs
            vmem_limit_bytes=32 * 1024 * 1024,   # headroom; footprint ~8 MiB
        ),
        # Reuse the input HBM buffer when the caller actually donates it.
        input_output_aliases=({0: 0} if donate_x else {}),
    )(x2)

    return out2.reshape(orig_shape)


def _reference(x, act, slope=0.05):
    """Pure-JAX reference mirroring the PyTorch forward, for verification."""
    shift = _SHIFT
    if act == "relu":
        return jax.nn.relu(x)
    if act == "leaky_relu":
        return jnp.where(x >= 0.0, x, 0.01 * x)
    if act == "sp":
        return jax.nn.softplus(x)
    if act == "leaky_sp":
        return jax.nn.softplus(x) - slope * jax.nn.relu(-x)
    if act == "elu":
        return jax.nn.elu(x)
    if act == "leaky_elu":
        return jax.nn.elu(x) - slope * jax.nn.relu(-x)
    if act == "ssp":
        return jax.nn.softplus(x) - shift
    if act == "leaky_ssp":
        return jax.nn.softplus(x) - slope * jax.nn.relu(-x) - shift
    if act == "tanh":
        return jnp.tanh(x)
    if act == "leaky_tanh":
        return jnp.tanh(x) + slope * x
    if act == "swish":
        return jax.nn.sigmoid(x) * x
    if act == "softsign":
        return x / (1.0 + jnp.abs(x))
    raise RuntimeError(act)


if __name__ == "__main__":
    key = jax.random.PRNGKey(0)
    k1, k2, k3, k4, k5 = jax.random.split(key, 5)
    acts = [
        "relu", "leaky_relu", "sp", "leaky_sp", "elu", "leaky_elu",
        "ssp", "leaky_ssp", "tanh", "leaky_tanh", "swish", "softsign",
    ]

    # Pallas path: 256 KiB f32, single full-extent block, all activations.
    x_main = jax.random.normal(k1, (8, 8, 32, 32), dtype=jnp.float32) * 3.0
    for a in acts:
        y = jax.block_until_ready(act_forward(x_main, a))
        y_ref = _reference(x_main, a)
        assert y.shape == x_main.shape and y.dtype == x_main.dtype
        err = float(jnp.max(jnp.abs(y - y_ref)))
        assert err < 1e-5, f"{a}: max abs err {err}"

    # Pallas path: ~1 MB f32, >=2-step parallel grid with a ragged last row-block.
    x_grid = jax.random.normal(k2, (5, 100, 512), dtype=jnp.float32) * 3.0
    for a in ("relu", "sp", "swish", "leaky_ssp", "tanh"):
        y = jax.block_until_ready(act_forward(x_grid, a))
        err = float(jnp.max(jnp.abs(y - _reference(x_grid, a))))
        assert y.shape == x_grid.shape and err < 1e-5, f"grid {a}: max abs err {err}"

    # bf16 Pallas path (native bf16 compute vs f32 reference -> loose tolerance).
    x_bf16 = (jax.random.normal(k3, (8, 16, 32, 32)) * 3.0).astype(jnp.bfloat16)
    for a in ("relu", "softsign", "swish", "sp", "tanh"):
        y = jax.block_until_ready(act_forward(x_bf16, a))
        y_ref = _reference(x_bf16.astype(jnp.float32), a)
        err = float(jnp.max(jnp.abs(y.astype(jnp.float32) - y_ref)))
        assert y.shape == x_bf16.shape and y.dtype == x_bf16.dtype and err < 1e-1, \
            f"bf16 {a}: max abs err {err}"

    # Small-input and ragged element-count fallbacks (fused XLA path).
    x_small = jax.random.normal(k4, (2, 4, 16, 16), dtype=jnp.float32) * 3.0
    x_ragged = jax.random.normal(k5, (3, 5, 7), dtype=jnp.float32) * 3.0
    for a in ("relu", "sp", "swish", "leaky_ssp"):
        for xx in (x_small, x_ragged):
            y = jax.block_until_ready(act_forward(xx, a))
            err = float(jnp.max(jnp.abs(y - _reference(xx, a))))
            assert y.shape == xx.shape and err < 1e-5, f"fallback {a}: max abs err {err}"

    print("KERNEL_OK")
</pallas_src>

<mosaic_0001>
module attributes {stable_mosaic.version = 11 : i64} {
  func.func @kernel(%arg0: i32, %arg1: memref<32x2048xf32, #tpu.memory_space<vmem>>, %arg2: memref<32x2048xf32, #tpu.memory_space<vmem>>) attributes {dimension_semantics = [#tpu.dimension_semantics<parallel>], iteration_bounds = array<i64: 1>, scalar_prefetch = 0 : i64, scratch_operands = 0 : i64, tpu.core_type = #tpu.core_type<tc>, window_params = [{transform_indices = @transform_0, window_bounds = array<i64: 32, 2048>}, {transform_indices = @transform_1, window_bounds = array<i64: 32, 2048>}]} {
    %c0 = arith.constant 0 : index
    %c0_0 = arith.constant 0 : index
    %0 = vector.load %arg1[%c0, %c0_0] : memref<32x2048xf32, #tpu.memory_space<vmem>>, vector<32x2048xf32>
    %cst = arith.constant 0.000000e+00 : f32
    %1 = vector.broadcast %cst : f32 to vector<32x2048xf32>
    %2 = arith.maximumf %0, %1 : vector<32x2048xf32>
    %c0_1 = arith.constant 0 : index
    %c0_2 = arith.constant 0 : index
    %3 = vector.load %arg2[%c0_1, %c0_2] : memref<32x2048xf32, #tpu.memory_space<vmem>>, vector<32x2048xf32>
    tpu.vector_store %arg2[%c0_1, %c0_2], %2 {strides = array<i32>} : memref<32x2048xf32, #tpu.memory_space<vmem>>, vector<32x2048xf32>,
    return
  }
  func.func @transform_0(%arg0: i32) -> (i32, i32) {
    %c0_i32 = arith.constant 0 : i32
    %c0_i32_0 = arith.constant 0 : i32
    return %arg0, %c0_i32 : i32, i32
  }
  func.func @transform_1(%arg0: i32) -> (i32, i32) {
    %c0_i32 = arith.constant 0 : i32
    %c0_i32_0 = arith.constant 0 : i32
    return %arg0, %c0_i32 : i32, i32
  }
}

</mosaic_0001>

<llo_original>
// kernel: act_forward.1
$region0: #{act_forward.1}
  #allocation0 [shape = 'u32[]', space=smem, size = 0x4, offset = 0x4, fixed_abs, tag = 'smem constant byte address 0x4 - core index']
  #allocation1 [shape = 'u32[144,128]{1,0:T(1,128)}', space=vmem, size = 0x12000, scoped, tag = 'internal scratch']
  %s0 = inlined_call_operand.vmem [shape: f32[32,2048], index: 0, kind: input, shape index: {}]
  %s1 = inlined_call_operand.vmem [shape: f32[32,2048], index: 1, kind: output, shape index: {}]
  %s2 = sld [smem:[#allocation0]]
  $region14: #{act_forward.1} parent=0
    _
  %s4 = ssub.s32 1, %s2
  %s5 = scalar_select 0, %s4, %s2
  // Predicated region
  $region2: #{act_forward.1} parent=0 // pred_check
    _
  $region3: #{act_forward.1} parent=0 // pred_check_branch
    %7 = sbr.rel (0) target = $region5
  $region4: #{act_forward.1} parent=0 // pred_region
    _
  $region5: #{act_forward.1} parent=0 // pred_fallthru
    _
  %v8 = vld [vmem:[%s0] sm:$0xff]
  %v9 = vld [vmem:[%s0 + $0x8] sm:$0xff]
  %v10 = vld [vmem:[%s0 + $0x10] sm:$0xff]
  %v11 = vld [vmem:[%s0 + $0x18] sm:$0xff]
  %v12 = vld [vmem:[%s0 + $0x20] sm:$0xff]
  %v13 = vld [vmem:[%s0 + $0x28] sm:$0xff]
  %v14 = vld [vmem:[%s0 + $0x30] sm:$0xff]
  %v15 = vld [vmem:[%s0 + $0x38] sm:$0xff]
  %v16 = vld [vmem:[%s0 + $0x40] sm:$0xff]
  %v17 = vld [vmem:[%s0 + $0x48] sm:$0xff]
  %v18 = vld [vmem:[%s0 + $0x50] sm:$0xff]
  %v19 = vld [vmem:[%s0 + $0x58] sm:$0xff]
  %v20 = vld [vmem:[%s0 + $0x60] sm:$0xff]
  %v21 = vld [vmem:[%s0 + $0x68] sm:$0xff]
  %v22 = vld [vmem:[%s0 + $0x70] sm:$0xff]
  %v23 = vld [vmem:[%s0 + $0x78] sm:$0xff]
  %v24 = vld [vmem:[%s0 + $0x80] sm:$0xff]
  %v25 = vld [vmem:[%s0 + $0x88] sm:$0xff]
  %v26 = vld [vmem:[%s0 + $0x90] sm:$0xff]
  %v27 = vld [vmem:[%s0 + $0x98] sm:$0xff]
  %v28 = vld [vmem:[%s0 + $0xa0] sm:$0xff]
  %v29 = vld [vmem:[%s0 + $0xa8] sm:$0xff]
  %v30 = vld [vmem:[%s0 + $0xb0] sm:$0xff]
  %v31 = vld [vmem:[%s0 + $0xb8] sm:$0xff]
  %v32 = vld [vmem:[%s0 + $0xc0] sm:$0xff]
  %v33 = vld [vmem:[%s0 + $0xc8] sm:$0xff]
  %v34 = vld [vmem:[%s0 + $0xd0] sm:$0xff]
  %v35 = vld [vmem:[%s0 + $0xd8] sm:$0xff]
  %v36 = vld [vmem:[%s0 + $0xe0] sm:$0xff]
  %v37 = vld [vmem:[%s0 + $0xe8] sm:$0xff]
  %v38 = vld [vmem:[%s0 + $0xf0] sm:$0xff]
  %v39 = vld [vmem:[%s0 + $0xf8] sm:$0xff]
  %v40 = vld [vmem:[%s0 + $0x100] sm:$0xff]
  %v41 = vld [vmem:[%s0 + $0x108] sm:$0xff]
  %v42 = vld [vmem:[%s0 + $0x110] sm:$0xff]
  %v43 = vld [vmem:[%s0 + $0x118] sm:$0xff]
  %v44 = vld [vmem:[%s0 + $0x120] sm:$0xff]
  %v45 = vld [vmem:[%s0 + $0x128] sm:$0xff]
  %v46 = vld [vmem:[%s0 + $0x130] sm:$0xff]
  %v47 = vld [vmem:[%s0 + $0x138] sm:$0xff]
  %v48 = vld [vmem:[%s0 + $0x140] sm:$0xff]
  %v49 = vld [vmem:[%s0 + $0x148] sm:$0xff]
  %v50 = vld [vmem:[%s0 + $0x150] sm:$0xff]
  %v51 = vld [vmem:[%s0 + $0x158] sm:$0xff]
  %v52 = vld [vmem:[%s0 + $0x160] sm:$0xff]
  %v53 = vld [vmem:[%s0 + $0x168] sm:$0xff]
  %v54 = vld [vmem:[%s0 + $0x170] sm:$0xff]
  %v55 = vld [vmem:[%s0 + $0x178] sm:$0xff]
  %v56 = vld [vmem:[%s0 + $0x180] sm:$0xff]
  %v57 = vld [vmem:[%s0 + $0x188] sm:$0xff]
  %v58 = vld [vmem:[%s0 + $0x190] sm:$0xff]
  %v59 = vld [vmem:[%s0 + $0x198] sm:$0xff]
  %v60 = vld [vmem:[%s0 + $0x1a0] sm:$0xff]
  %v61 = vld [vmem:[%s0 + $0x1a8] sm:$0xff]
  %v62 = vld [vmem:[%s0 + $0x1b0] sm:$0xff]
  %v63 = vld [vmem:[%s0 + $0x1b8] sm:$0xff]
  %v64 = vld [vmem:[%s0 + $0x1c0] sm:$0xff]
  %v65 = vld [vmem:[%s0 + $0x1c8] sm:$0xff]
  %v66 = vld [vmem:[%s0 + $0x1d0] sm:$0xff]
  %v67 = vld [vmem:[%s0 + $0x1d8] sm:$0xff]
  %v68 = vld [vmem:[%s0 + $0x1e0] sm:$0xff]
  %v69 = vld [vmem:[%s0 + $0x1e8] sm:$0xff]
  %v70 = vld [vmem:[%s0 + $0x1f0] sm:$0xff]
  %v71 = vld [vmem:[%s0 + $0x1f8] sm:$0xff]
  %v72 = vmax.f32 %v8, 0.0
  %v73 = vmax.f32 %v9, 0.0
  %v74 = vmax.f32 %v10, 0.0
  %v75 = vmax.f32 %v11, 0.0
  %v76 = vmax.f32 %v12, 0.0
  %v77 = vmax.f32 %v13, 0.0
  %v78 = vmax.f32 %v14, 0.0
  %v79 = vmax.f32 %v15, 0.0
  %v80 = vmax.f32 %v16, 0.0
  %v81 = vmax.f32 %v17, 0.0
  %v82 = vmax.f32 %v18, 0.0
  %v83 = vmax.f32 %v19, 0.0
  %v84 = vmax.f32 %v20, 0.0
  %v85 = vmax.f32 %v21, 0.0
  %v86 = vmax.f32 %v22, 0.0
  %v87 = vmax.f32 %v23, 0.0
  %v88 = vmax.f32 %v24, 0.0
  %v89 = vmax.f32 %v25, 0.0
  %v90 = vmax.f32 %v26, 0.0
  %v91 = vmax.f32 %v27, 0.0
  %v92 = vmax.f32 %v28, 0.0
  %v93 = vmax.f32 %v29, 0.0
  %v94 = vmax.f32 %v30, 0.0
  %v95 = vmax.f32 %v31, 0.0
  %v96 = vmax.f32 %v32, 0.0
  %v97 = vmax.f32 %v33, 0.0
  %v98 = vmax.f32 %v34, 0.0
  %v99 = vmax.f32 %v35, 0.0
  %v100 = vmax.f32 %v36, 0.0
  %v101 = vmax.f32 %v37, 0.0
  %v102 = vmax.f32 %v38, 0.0
  %v103 = vmax.f32 %v39, 0.0
  %v104 = vmax.f32 %v40, 0.0
  %v105 = vmax.f32 %v41, 0.0
  %v106 = vmax.f32 %v42, 0.0
  %v107 = vmax.f32 %v43, 0.0
  %v108 = vmax.f32 %v44, 0.0
  %v109 = vmax.f32 %v45, 0.0
  %v110 = vmax.f32 %v46, 0.0
  %v111 = vmax.f32 %v47, 0.0
  %v112 = vmax.f32 %v48, 0.0
  %v113 = vmax.f32 %v49, 0.0
  %v114 = vmax.f32 %v50, 0.0
  %v115 = vmax.f32 %v51, 0.0
  %v116 = vmax.f32 %v52, 0.0
  %v117 = vmax.f32 %v53, 0.0
  %v118 = vmax.f32 %v54, 0.0
  %v119 = vmax.f32 %v55, 0.0
  %v120 = vmax.f32 %v56, 0.0
  %v121 = vmax.f32 %v57, 0.0
  %v122 = vmax.f32 %v58, 0.0
  %v123 = vmax.f32 %v59, 0.0
  %v124 = vmax.f32 %v60, 0.0
  %v125 = vmax.f32 %v61, 0.0
  %v126 = vmax.f32 %v62, 0.0
  %v127 = vmax.f32 %v63, 0.0
  %v128 = vmax.f32 %v64, 0.0
  %v129 = vmax.f32 %v65, 0.0
  %v130 = vmax.f32 %v66, 0.0
  %v131 = vmax.f32 %v67, 0.0
  %v132 = vmax.f32 %v68, 0.0
  %v133 = vmax.f32 %v69, 0.0
  %v134 = vmax.f32 %v70, 0.0
  %v135 = vmax.f32 %v71, 0.0
  %136 = vst [vmem:[%s1] sm:$0xff] %v72
  %137 = vst [vmem:[%s1 + $0x8] sm:$0xff] %v73
  %138 = vst [vmem:[%s1 + $0x10] sm:$0xff] %v74
  %139 = vst [vmem:[%s1 + $0x18] sm:$0xff] %v75
  %140 = vst [vmem:[%s1 + $0x20] sm:$0xff] %v76
  %141 = vst [vmem:[%s1 + $0x28] sm:$0xff] %v77
  %142 = vst [vmem:[%s1 + $0x30] sm:$0xff] %v78
  %143 = vst [vmem:[%s1 + $0x38] sm:$0xff] %v79
  %144 = vst [vmem:[%s1 + $0x40] sm:$0xff] %v80
  %145 = vst [vmem:[%s1 + $0x48] sm:$0xff] %v81
  %146 = vst [vmem:[%s1 + $0x50] sm:$0xff] %v82
  %147 = vst [vmem:[%s1 + $0x58] sm:$0xff] %v83
  %148 = vst [vmem:[%s1 + $0x60] sm:$0xff] %v84
  %149 = vst [vmem:[%s1 + $0x68] sm:$0xff] %v85
  %150 = vst [vmem:[%s1 + $0x70] sm:$0xff] %v86
  %151 = vst [vmem:[%s1 + $0x78] sm:$0xff] %v87
  %152 = vst [vmem:[%s1 + $0x80] sm:$0xff] %v88
  %153 = vst [vmem:[%s1 + $0x88] sm:$0xff] %v89
  %154 = vst [vmem:[%s1 + $0x90] sm:$0xff] %v90
  %155 = vst [vmem:[%s1 + $0x98] sm:$0xff] %v91
  %156 = vst [vmem:[%s1 + $0xa0] sm:$0xff] %v92
  %157 = vst [vmem:[%s1 + $0xa8] sm:$0xff] %v93
  %158 = vst [vmem:[%s1 + $0xb0] sm:$0xff] %v94
  %159 = vst [vmem:[%s1 + $0xb8] sm:$0xff] %v95
  %160 = vst [vmem:[%s1 + $0xc0] sm:$0xff] %v96
  %161 = vst [vmem:[%s1 + $0xc8] sm:$0xff] %v97
  %162 = vst [vmem:[%s1 + $0xd0] sm:$0xff] %v98
  %163 = vst [vmem:[%s1 + $0xd8] sm:$0xff] %v99
  %164 = vst [vmem:[%s1 + $0xe0] sm:$0xff] %v100
  %165 = vst [vmem:[%s1 + $0xe8] sm:$0xff] %v101
  %166 = vst [vmem:[%s1 + $0xf0] sm:$0xff] %v102
  %167 = vst [vmem:[%s1 + $0xf8] sm:$0xff] %v103
  %168 = vst [vmem:[%s1 + $0x100] sm:$0xff] %v104
  %169 = vst [vmem:[%s1 + $0x108] sm:$0xff] %v105
  %170 = vst [vmem:[%s1 + $0x110] sm:$0xff] %v106
  %171 = vst [vmem:[%s1 + $0x118] sm:$0xff] %v107
  %172 = vst [vmem:[%s1 + $0x120] sm:$0xff] %v108
  %173 = vst [vmem:[%s1 + $0x128] sm:$0xff] %v109
  %174 = vst [vmem:[%s1 + $0x130] sm:$0xff] %v110
  %175 = vst [vmem:[%s1 + $0x138] sm:$0xff] %v111
  %176 = vst [vmem:[%s1 + $0x140] sm:$0xff] %v112
  %177 = vst [vmem:[%s1 + $0x148] sm:$0xff] %v113
  %178 = vst [vmem:[%s1 + $0x150] sm:$0xff] %v114
  %179 = vst [vmem:[%s1 + $0x158] sm:$0xff] %v115
  %180 = vst [vmem:[%s1 + $0x160] sm:$0xff] %v116
  %181 = vst [vmem:[%s1 + $0x168] sm:$0xff] %v117
  %182 = vst [vmem:[%s1 + $0x170] sm:$0xff] %v118
  %183 = vst [vmem:[%s1 + $0x178] sm:$0xff] %v119
  %184 = vst [vmem:[%s1 + $0x180] sm:$0xff] %v120
  %185 = vst [vmem:[%s1 + $0x188] sm:$0xff] %v121
  %186 = vst [vmem:[%s1 + $0x190] sm:$0xff] %v122
  %187 = vst [vmem:[%s1 + $0x198] sm:$0xff] %v123
  %188 = vst [vmem:[%s1 + $0x1a0] sm:$0xff] %v124
  %189 = vst [vmem:[%s1 + $0x1a8] sm:$0xff] %v125
  %190 = vst [vmem:[%s1 + $0x1b0] sm:$0xff] %v126
  %191 = vst [vmem:[%s1 + $0x1b8] sm:$0xff] %v127
  %192 = vst [vmem:[%s1 + $0x1c0] sm:$0xff] %v128
  %193 = vst [vmem:[%s1 + $0x1c8] sm:$0xff] %v129
  %194 = vst [vmem:[%s1 + $0x1d0] sm:$0xff] %v130
  %195 = vst [vmem:[%s1 + $0x1d8] sm:$0xff] %v131
  %196 = vst [vmem:[%s1 + $0x1e0] sm:$0xff] %v132
  %197 = vst [vmem:[%s1 + $0x1e8] sm:$0xff] %v133
  %198 = vst [vmem:[%s1 + $0x1f0] sm:$0xff] %v134
  %199 = vst [vmem:[%s1 + $0x1f8] sm:$0xff] %v135
  // Predicated region
  $region6: #{act_forward.1} parent=0 // pred_check
    _
  $region7: #{act_forward.1} parent=0 // pred_check_branch
    %201 = sbr.rel (0) target = $region9
  $region8: #{act_forward.1} parent=0 // pred_region
    _
  $region9: #{act_forward.1} parent=0 // pred_fallthru
    _
  // Predicated region
  $region10: #{act_forward.1} parent=0 // pred_check
    _
  $region11: #{act_forward.1} parent=0 // pred_check_branch
    %203 = sbr.rel (0) target = $region13
  $region12: #{act_forward.1} parent=0 // pred_region
    _
  $region13: #{act_forward.1} parent=0 // pred_fallthru
    _

</llo_original>
